<compile_context>
chip_gen: v7x
topology: tpu7x:2x2x1
jax: 0.10.0
libtpu: 0.0.40
codegen_flags: <defaults>
</compile_context>

<pallas_src>
import math
import functools

import jax
import jax.numpy as jnp
from jax import lax
from jax.experimental import pallas as pl
from jax.experimental.pallas import tpu as pltpu


# ------------------------------ helpers --------------------------------------

def _pick_tile(n, cap, mult=8):
    """Largest divisor of n that is <= cap, preferring multiples of `mult`."""
    cap = max(1, min(n, cap))
    best, best_m = 1, None
    for t in range(1, cap + 1):
        if n % t == 0:
            best = t
            if t % mult == 0:
                best_m = t
    return best_m if best_m is not None else best


def _pick_unroll(tl, n_state, d_inner):
    """Scan window length, bounded so the hoisted (U,N,D) temporaries
    (exp(dt*A), dt*u*B, stacked h) stay within a conservative vreg budget."""
    budget = 160 * 1024
    for u in (8, 4, 2, 1):
        if tl % u == 0 and 3 * u * n_state * d_inner * 4 <= budget:
            return u
    return 1


def _mosaic(sem, step_bytes):
    """Per-kernel CompilerParams; VMEM cap derived from the per-step working set."""
    lim = int(min(48 * 1024 * 1024, max(16 * 1024 * 1024, 4 * step_bytes)))
    return pltpu.CompilerParams(dimension_semantics=sem, vmem_limit_bytes=lim)


# ----------------------------- Pallas kernels --------------------------------

def _mm_kernel(a_ref, b_ref, o_ref):
    """Row-tile matmul: bf16 operands (cast in-kernel), f32 accumulate."""
    o_ref[...] = jnp.dot(a_ref[...].astype(jnp.bfloat16), b_ref[...],
                         preferred_element_type=jnp.float32).astype(o_ref.dtype)


def matmul_rows(a, b_bf16, out_dtype=jnp.bfloat16, row_tile=1024):
    """(M,K)@(K,N) with the M axis gridded (lane-dense N kept whole)."""
    M, Kd = a.shape
    _, Nd = b_bf16.shape
    TM = _pick_tile(M, row_tile)
    step = TM * Kd * a.dtype.itemsize + Kd * Nd * 2 + TM * Nd * jnp.dtype(out_dtype).itemsize
    return pl.pallas_call(
        _mm_kernel,
        grid=(M // TM,),
        in_specs=[pl.BlockSpec((TM, Kd), lambda i: (i, 0)),
                  pl.BlockSpec((Kd, Nd), lambda i: (0, 0))],
        out_specs=pl.BlockSpec((TM, Nd), lambda i: (i, 0)),
        out_shape=jax.ShapeDtypeStruct((M, Nd), out_dtype),
        compiler_params=_mosaic(("parallel",), step),
    )(a, b_bf16)


def xproj(xs2, w_combo, row_tile=1024):
    """Folded x_proj/dt_proj per direction: (BL,D)@(D,D+2N) -> [dt|B|C].
    Direction k reads stream k%2 of xs2 (0=row-major, 1=col-major)."""
    _, BL, D = xs2.shape
    K, _, E = w_combo.shape
    TM = _pick_tile(BL, row_tile)
    step = TM * D * 2 + D * E * 2 + TM * E * 2
    return pl.pallas_call(
        _mm_kernel,
        grid=(K, BL // TM),
        in_specs=[pl.BlockSpec((pl.Squeezed(), TM, D), lambda k, i: (k % 2, i, 0)),
                  pl.BlockSpec((pl.Squeezed(), D, E), lambda k, i: (k, 0, 0))],
        out_specs=pl.BlockSpec((pl.Squeezed(), TM, E), lambda k, i: (k, i, 0)),
        out_shape=jax.ShapeDtypeStruct((K, BL, E), jnp.bfloat16),
        compiler_params=_mosaic(("parallel", "parallel"), step),
    )(xs2, w_combo)


def _dwconv_silu_kernel(xm_ref, xh1_ref, xh2_ref, w_ref, b_ref, o_ref,
                        *, TH, W, C, KS):
    xall = jnp.concatenate([xm_ref[...], xh1_ref[...], xh2_ref[...]],
                           axis=0).astype(jnp.float32)            # (TH+2, W+2, C)
    acc = jnp.zeros((TH, W, C), jnp.float32)
    # TODO(synk): sublane-align the kw taps (pltpu.roll on the W axis) to avoid
    # the relayout copies from the kw=1,2 offsets.
    for i in range(KS * KS):
        kh, kw = divmod(i, KS)
        acc = acc + xall[kh:kh + TH, kw:kw + W, :] * w_ref[i, :][None, None, :]
    acc = acc + b_ref[0, :][None, None, :]
    o_ref[...] = (acc * jax.nn.sigmoid(acc)).astype(o_ref.dtype)  # SiLU


def dwconv_silu(x_nhwc, w9, bias, KS=3, tile_bytes=2 * 1024 * 1024):
    """Depthwise 3x3 conv (padding 1) + SiLU, row-tiled with a 2-row halo
    delivered through two extra single-row BlockSpecs (auto-pipelined)."""
    assert KS == 3, "halo layout below assumes a 3x3 depthwise conv"
    B, H, W, C = x_nhwc.shape
    p = (KS - 1) // 2
    xp = jnp.pad(x_nhwc, ((0, 0), (p, p), (p, p), (0, 0)))
    Wp = W + 2 * p
    row_bytes = Wp * C * x_nhwc.dtype.itemsize
    TH = _pick_tile(H, max(1, tile_bytes // max(1, row_bytes)), mult=1)
    nH = H // TH
    kernel = functools.partial(_dwconv_silu_kernel, TH=TH, W=W, C=C, KS=KS)
    step = (TH + 2) * Wp * C * 2 + TH * W * C * 2 + KS * KS * C * 4
    return pl.pallas_call(
        kernel,
        grid=(B, nH),
        in_specs=[
            pl.BlockSpec((pl.Squeezed(), TH, Wp, C), lambda b, r: (b, r, 0, 0)),
            pl.BlockSpec((pl.Squeezed(), 1, Wp, C),
                         lambda b, r: (b, r * TH + TH, 0, 0)),
            pl.BlockSpec((pl.Squeezed(), 1, Wp, C),
                         lambda b, r: (b, r * TH + TH + 1, 0, 0)),
            pl.BlockSpec((KS * KS, C), lambda b, r: (0, 0)),
            pl.BlockSpec((1, C), lambda b, r: (0, 0)),
        ],
        out_specs=pl.BlockSpec((pl.Squeezed(), TH, W, C), lambda b, r: (b, r, 0, 0)),
        out_shape=jax.ShapeDtypeStruct((B, H, W, C), jnp.bfloat16),
        compiler_params=_mosaic(("parallel", "parallel"), step),
    )(xp, xp, xp, w9, bias)


def _scan_kernel(uf_ref, ub_ref, xf_ref, xb_ref, Af_ref, Ab_ref,
                 Df_ref, Db_ref, tbf_ref, tbb_ref,
                 yf_ref, yb_ref, h_ref, *, N, D, TL, U):
    """Mamba selective scan for one (batch, stream, L-chunk) grid step.

    Each step advances two directions sharing one input stream:
      * forward direction (dir = stream)     over chunk c,
      * reversed direction (dir = stream+2)  over chunk nc-1-c, walked backwards.
    Hidden state is carried across chunks in VMEM scratch h_ref[(fwd, bwd)], so
    the chunk grid axis MUST stay sequential ("arbitrary") and ascending.
    y is stored back in natural position order (the reversal is folded in), so
    no inverse gather is needed downstream.
    """
    @pl.when(pl.program_id(2) == 0)
    def _():
        h_ref[...] = jnp.zeros((2, N, D), jnp.float32)

    nwin = TL // U

    def run(u_ref, x_ref, A, Dv, dtb, y_ref, slot, reverse):
        def window(j, h):
            t0 = ((nwin - 1 - j) if reverse else j) * U
            t0 = pl.multiple_of(t0, U)
            # ---- hoisted, vectorized window math (off the serial chain) ----
            x_w = x_ref[pl.ds(t0, U), :].astype(jnp.float32)        # (U, D+2N)
            u_w = u_ref[pl.ds(t0, U), :].astype(jnp.float32)        # (U, D)
            dt_w = x_w[:, 0:D] + dtb
            dl_w = jnp.where(dt_w > 20.0, dt_w,                      # softplus
                             jnp.log1p(jnp.exp(jnp.minimum(dt_w, 20.0))))
            B_w = x_w[:, D:D + N]                                    # (U, N)
            C_w = x_w[:, D + N:D + 2 * N]                            # (U, N)
            dA_w = jnp.exp(dl_w[:, None, :] * A[None, :, :])         # (U, N, D)
            dBu_w = (dl_w * u_w)[:, None, :] * B_w[:, :, None]       # (U, N, D)
            du_w = u_w * Dv                                          # (U, D)
            # ---- serial chain: one (N,D) FMA per timestep ----
            hs = [None] * U
            steps = range(U - 1, -1, -1) if reverse else range(U)
            for i in steps:
                h = dA_w[i] * h + dBu_w[i]
                hs[i] = h
            # ---- batched readout (off the serial chain) ----
            H_w = jnp.stack(hs, axis=0)                              # (U, N, D)
            y_w = jnp.sum(C_w[:, :, None] * H_w, axis=1) + du_w      # (U, D)
            y_ref[pl.ds(t0, U), :] = y_w.astype(y_ref.dtype)
            return h

        h_out = lax.fori_loop(0, nwin, window, h_ref[slot])
        h_ref[slot] = h_out

    # TODO(synk): on v6e/v7x the exp() above could run in bf16 (f32 on v5e).
    run(uf_ref, xf_ref, Af_ref[...], Df_ref[...], tbf_ref[...], yf_ref, 0, False)
    run(ub_ref, xb_ref, Ab_ref[...], Db_ref[...], tbb_ref[...], yb_ref, 1, True)


def selective_scan(xs2_sb, xdbl_kb, A_knd, Ds_k, dtb_k, *, B, L, K, N, D,
                   chunk_cap=512):
    """xs2_sb: (2B, L, D) bf16 streams (row-major / col-major position order).
       xdbl_kb: (K*B, L, D+2N) bf16, [dt|B|C] per direction, position order.
       Returns (y_fwd, y_bwd), each (2B, L, D) bf16 in position order
       (y_fwd = dirs 0,1; y_bwd = dirs 2,3)."""
    E = D + 2 * N
    TL = _pick_tile(L, chunk_cap)
    nc = L // TL
    U = _pick_unroll(TL, N, D)
    kernel = functools.partial(_scan_kernel, N=N, D=D, TL=TL, U=U)
    step = (4 * TL * D * 2 + 2 * TL * E * 2 + 2 * N * D * 4 * 2 + 6 * D * 4)
    return pl.pallas_call(
        kernel,
        grid=(B, 2, nc),
        in_specs=[
            # u: forward chunk / reversed-direction chunk, same stream s
            pl.BlockSpec((pl.Squeezed(), TL, D), lambda b, s, c: (s * B + b, c, 0)),
            pl.BlockSpec((pl.Squeezed(), TL, D),
                         lambda b, s, c: (s * B + b, nc - 1 - c, 0)),
            # [dt|B|C]: direction s (fwd) and direction s+2 (bwd)
            pl.BlockSpec((pl.Squeezed(), TL, E), lambda b, s, c: (s * B + b, c, 0)),
            pl.BlockSpec((pl.Squeezed(), TL, E),
                         lambda b, s, c: ((s + 2) * B + b, nc - 1 - c, 0)),
            # A, D, dt_bias per direction
            pl.BlockSpec((pl.Squeezed(), N, D), lambda b, s, c: (s, 0, 0)),
            pl.BlockSpec((pl.Squeezed(), N, D), lambda b, s, c: (s + 2, 0, 0)),
            pl.BlockSpec((pl.Squeezed(), 1, D), lambda b, s, c: (s, 0, 0)),
            pl.BlockSpec((pl.Squeezed(), 1, D), lambda b, s, c: (s + 2, 0, 0)),
            pl.BlockSpec((pl.Squeezed(), 1, D), lambda b, s, c: (s, 0, 0)),
            pl.BlockSpec((pl.Squeezed(), 1, D), lambda b, s, c: (s + 2, 0, 0)),
        ],
        out_specs=[
            pl.BlockSpec((pl.Squeezed(), TL, D), lambda b, s, c: (s * B + b, c, 0)),
            pl.BlockSpec((pl.Squeezed(), TL, D),
                         lambda b, s, c: (s * B + b, nc - 1 - c, 0)),
        ],
        out_shape=(jax.ShapeDtypeStruct((2 * B, L, D), jnp.bfloat16),
                   jax.ShapeDtypeStruct((2 * B, L, D), jnp.bfloat16)),
        scratch_shapes=[pltpu.VMEM((2, N, D), jnp.float32)],
        # chunk axis carries the recurrence -> keep it "arbitrary" (sequential).
        compiler_params=_mosaic(("parallel", "parallel", "arbitrary"), step),
    )(xs2_sb, xs2_sb, xdbl_kb, xdbl_kb, A_knd, A_knd, Ds_k, Ds_k, dtb_k, dtb_k)


def _gate_norm_out_kernel(y0_ref, y1_ref, y2_ref, y3_ref, g_ref, z_ref,
                          gamma_ref, beta_ref, w_ref, o_ref, *, eps=1e-5):
    g = g_ref[...].astype(jnp.float32)                               # (4, D)
    ys = (y0_ref[...].astype(jnp.float32) * g[0:1, :]
          + y1_ref[...].astype(jnp.float32) * g[1:2, :]
          + y2_ref[...].astype(jnp.float32) * g[2:3, :]
          + y3_ref[...].astype(jnp.float32) * g[3:4, :])             # (TR, D)
    mu = jnp.mean(ys, axis=-1, keepdims=True)
    var = jnp.mean((ys - mu) ** 2, axis=-1, keepdims=True)
    yn = (ys - mu) * lax.rsqrt(var + eps)
    yn = yn * gamma_ref[...] + beta_ref[...]
    z = z_ref[...].astype(jnp.float32)
    h = yn * (z * jax.nn.sigmoid(z))                                 # * SiLU(z)
    o_ref[...] = jnp.dot(h.astype(jnp.bfloat16), w_ref[...],
                         preferred_element_type=jnp.float32)


def gate_norm_out(y0, y1, y2, y3, gate, z, gamma, beta, wout_pad, row_tile=1024):
    """Fused gate-mul + 4-way direction sum + LayerNorm + SiLU(z) gate + out_proj.
    out_proj columns are pre-padded to a 128-lane multiple -> lane-dense stores."""
    B = gate.shape[0]
    L, D = z.shape[1], z.shape[2]
    Dm_pad = wout_pad.shape[-1]
    TR = _pick_tile(L, row_tile)
    step = 5 * TR * D * 2 + D * Dm_pad * 2 + TR * Dm_pad * 4
    yspec = pl.BlockSpec((pl.Squeezed(), TR, D), lambda b, r: (b, r, 0))
    return pl.pallas_call(
        _gate_norm_out_kernel,
        grid=(B, L // TR),
        in_specs=[
            yspec, yspec, yspec, yspec,
            pl.BlockSpec((pl.Squeezed(), 4, D), lambda b, r: (b, 0, 0)),
            yspec,
            pl.BlockSpec((1, D), lambda b, r: (0, 0)),
            pl.BlockSpec((1, D), lambda b, r: (0, 0)),
            pl.BlockSpec((D, Dm_pad), lambda b, r: (0, 0)),
        ],
        out_specs=pl.BlockSpec((pl.Squeezed(), TR, Dm_pad), lambda b, r: (b, r, 0)),
        out_shape=jax.ShapeDtypeStruct((B, L, Dm_pad), jnp.float32),
        compiler_params=_mosaic(("parallel", "parallel"), step),
    )(y0, y1, y2, y3, gate, z, gamma, beta, wout_pad)


# ----------------------------- parameters / glue ------------------------------

def init_vmm_params(key, d_model, d_state=16, d_conv=3, expand=2.0, dt_rank=1,
                    dt_min=0.001, dt_max=0.1, dt_init_floor=1e-4):
    d_inner = int(expand * d_model)
    K = 4
    ks = jax.random.split(key, 8)
    p = {}
    p["in_proj_w"] = jax.random.normal(ks[0], (d_model, 2 * d_inner), jnp.float32) \
        * (1.0 / math.sqrt(d_model))
    p["conv_w"] = jax.random.normal(ks[1], (d_conv * d_conv, d_inner), jnp.float32) \
        * (1.0 / d_conv)
    p["conv_b"] = jnp.zeros((1, d_inner), jnp.float32)
    p["x_proj_w"] = jax.random.normal(
        ks[2], (K, dt_rank + 2 * d_state, d_inner), jnp.float32) \
        * (1.0 / math.sqrt(d_inner))
    std = dt_rank ** -0.5
    p["dt_proj_w"] = jax.random.uniform(
        ks[3], (K, d_inner, dt_rank), jnp.float32, -std, std)
    dt = jnp.exp(jax.random.uniform(ks[4], (K, d_inner), jnp.float32)
                 * (math.log(dt_max) - math.log(dt_min)) + math.log(dt_min))
    dt = jnp.maximum(dt, dt_init_floor)
    p["dt_proj_b"] = dt + jnp.log(-jnp.expm1(-dt))        # inverse softplus
    A = jnp.tile(jnp.arange(1, d_state + 1, dtype=jnp.float32)[None, :],
                 (K * d_inner, 1))
    p["A_logs"] = jnp.log(A)
    p["Ds"] = jnp.ones((K * d_inner,), jnp.float32)
    p["ln_gamma"] = jnp.ones((1, d_inner), jnp.float32)
    p["ln_beta"] = jnp.zeros((1, d_inner), jnp.float32)
    p["out_proj_w"] = jax.random.normal(ks[5], (d_inner, d_model), jnp.float32) \
        * (1.0 / math.sqrt(d_inner))
    p["gate_w"] = jax.random.normal(ks[6], (4 * d_inner, 4), jnp.float32) * 0.5
    p["gate_b"] = jnp.zeros((4 * d_inner,), jnp.float32)
    return p


def prepare_params(p, *, d_state, dt_rank, K=4):
    """One-time weight prep: bf16 casts, folded x_proj/dt_proj, scan layouts,
    lane-padded out_proj.  Done once, not per forward call."""
    D = p["ln_gamma"].shape[-1]
    N, R = d_state, dt_rank
    prep = {"d_inner": D, "d_state": N, "dt_rank": R, "K": K}
    prep["in_w"] = p["in_proj_w"].astype(jnp.bfloat16)
    prep["conv_w"] = p["conv_w"]
    prep["conv_b"] = p["conv_b"]
    wx, wdt = p["x_proj_w"], p["dt_proj_w"]
    w_fold = jnp.einsum("krd,ker->kde", wx[:, :R, :], wdt)          # (K, D, D)
    w_bc = jnp.transpose(wx[:, R:, :], (0, 2, 1))                   # (K, D, 2N)
    prep["w_combo"] = jnp.concatenate([w_fold, w_bc], -1).astype(jnp.bfloat16)
    A = -jnp.exp(p["A_logs"])                                       # (K*D, N)
    prep["A_knd"] = jnp.transpose(A.reshape(K, D, N), (0, 2, 1))    # (K, N, D)
    prep["Ds"] = p["Ds"].reshape(K, 1, D)
    prep["dt_bias"] = p["dt_proj_b"].reshape(K, 1, D)
    prep["ln_gamma"] = p["ln_gamma"]
    prep["ln_beta"] = p["ln_beta"]
    Dm = p["out_proj_w"].shape[-1]
    Dm_pad = ((Dm + 127) // 128) * 128
    wout = p["out_proj_w"]
    if Dm_pad != Dm:
        wout = jnp.pad(wout, ((0, 0), (0, Dm_pad - Dm)))
    prep["wout"] = wout.astype(jnp.bfloat16)
    prep["d_model"] = Dm
    prep["wg"] = p["gate_w"].reshape(D, K, K)
    prep["bg"] = p["gate_b"].reshape(D, K)
    return prep


def vmm_forward(x, prep):
    """x: (B, H, W, d_model) f32 -> (B, H, W, d_model) f32.
    The 4 MaIR scan orders (row-major, col-major and their reverses) are realized
    structurally: 2 streams + reversed chunk index_maps inside the scan kernel."""
    B, H, W, Cm = x.shape
    D, N, K = prep["d_inner"], prep["d_state"], prep["K"]
    L = H * W

    # ----- in_proj -----
    xz = matmul_rows(x.reshape(B * L, Cm), prep["in_w"])            # (B*L, 2D) bf16
    xz = xz.reshape(B, H, W, 2 * D)
    xin, z = xz[..., :D], xz[..., D:]

    # ----- depthwise 3x3 conv + SiLU -----
    xc = dwconv_silu(xin, prep["conv_w"], prep["conv_b"])           # (B,H,W,D) bf16

    # ----- the two scan streams (row-major / col-major position order) -----
    x_rm = xc.reshape(B, L, D)
    x_cm = jnp.transpose(xc, (0, 2, 1, 3)).reshape(B, L, D)
    xs2 = jnp.stack([x_rm, x_cm], axis=0)                           # (2,B,L,D) bf16

    # ----- folded x_proj / dt_proj per direction -> [dt | B | C] -----
    xdbl = xproj(xs2.reshape(2, B * L, D), prep["w_combo"])         # (K,B*L,D+2N)
    xdbl_kb = xdbl.reshape(K * B, L, D + 2 * N)

    # ----- selective scan (4 directions = 2 streams x {fwd, bwd}) -----
    y_f, y_b = selective_scan(xs2.reshape(2 * B, L, D), xdbl_kb,
                              prep["A_knd"], prep["Ds"], prep["dt_bias"],
                              B=B, L=L, K=K, N=N, D=D)

    # ----- ShuffleAttn gating (global pool + per-channel 4x4 mix; tiny) -----
    m0 = jnp.mean(y_f[:B].astype(jnp.float32), axis=1)
    m1 = jnp.mean(y_f[B:].astype(jnp.float32), axis=1)
    m2 = jnp.mean(y_b[:B].astype(jnp.float32), axis=1)
    m3 = jnp.mean(y_b[B:].astype(jnp.float32), axis=1)
    pooled = jnp.stack([m0, m1, m2, m3], axis=1)                    # (B,K,D)
    gate = jax.nn.sigmoid(jnp.einsum("bid,dji->bjd", pooled, prep["wg"])
                          + jnp.transpose(prep["bg"])[None])        # (B,K,D)

    # dirs 1,3 are stored in col-major position order -> one transpose back each.
    # TODO(synk): fold these transposes into gate_norm_out's BlockSpecs (read
    # (W, TR//W, D) image blocks from the col-major array) to drop this pass.
    y1t = jnp.transpose(y_f[B:].reshape(B, W, H, D), (0, 2, 1, 3)).reshape(B, L, D)
    y3t = jnp.transpose(y_b[B:].reshape(B, W, H, D), (0, 2, 1, 3)).reshape(B, L, D)

    # ----- fused gate-mul + 4-way sum + LayerNorm + SiLU(z) + out_proj -----
    out = gate_norm_out(y_f, y1t, y_b, y3t, gate, z.reshape(B, L, D),
                        prep["ln_gamma"], prep["ln_beta"], prep["wout"])
    dm = prep["d_model"]
    if out.shape[-1] != dm:
        out = out[..., :dm]
    return out.reshape(B, H, W, dm)


# ----------------------------------- main -------------------------------------

if __name__ == "__main__":
    B, d_model, H, W = 2, 16, 8, 8
    d_state, d_conv, expand = 16, 3, 2.0
    dt_rank = math.ceil(d_model / 16)

    key = jax.random.PRNGKey(0)
    kp, kx = jax.random.split(key)
    params = init_vmm_params(kp, d_model, d_state, d_conv, expand, dt_rank)
    prep = prepare_params(params, d_state=d_state, dt_rank=dt_rank)
    x = jax.random.normal(kx, (B, H, W, d_model), jnp.float32)

    out = vmm_forward(x, prep)
    out = jax.block_until_ready(out)
    assert out.shape == (B, H, W, d_model) and out.dtype == jnp.float32
    print("KERNEL_OK")
</pallas_src>

<mosaic_0001>
module attributes {stable_mosaic.version = 11 : i64} {
  func.func @_mm_kernel(%arg0: i32, %arg1: memref<128x16xf32, #tpu.memory_space<vmem>>, %arg2: memref<16x64xbf16, #tpu.memory_space<vmem>>, %arg3: memref<128x64xbf16, #tpu.memory_space<vmem>>) attributes {dimension_semantics = [#tpu.dimension_semantics<parallel>], iteration_bounds = array<i64: 1>, scalar_prefetch = 0 : i64, scratch_operands = 0 : i64, tpu.core_type = #tpu.core_type<tc>, window_params = [{transform_indices = @transform_0, window_bounds = array<i64: 128, 16>}, {pipeline_mode = #tpu.pipeline_mode<synchronous>, transform_indices = @transform_1, window_bounds = array<i64: 16, 64>}, {transform_indices = @transform_2, window_bounds = array<i64: 128, 64>}]} {
    %c0 = arith.constant 0 : index
    %c0_0 = arith.constant 0 : index
    %0 = vector.load %arg1[%c0, %c0_0] : memref<128x16xf32, #tpu.memory_space<vmem>>, vector<128x16xf32>
    %1 = arith.truncf %0 : vector<128x16xf32> to vector<128x16xbf16>
    %c0_1 = arith.constant 0 : index
    %c0_2 = arith.constant 0 : index
    %2 = vector.load %arg2[%c0_1, %c0_2] : memref<16x64xbf16, #tpu.memory_space<vmem>>, vector<16x64xbf16>
    %cst = arith.constant dense<0.000000e+00> : vector<128x64xf32>
    %3 = tpu.matmul %1, %2, %cst {dimension_numbers = #tpu.dot_dimension_numbers<[1], [0], [0], [1], [0, 0, 1, 1], [], []>} : vector<128x16xbf16>, vector<16x64xbf16>, vector<128x64xf32> -> vector<128x64xf32>
    %4 = arith.truncf %3 : vector<128x64xf32> to vector<128x64xbf16>
    %c0_3 = arith.constant 0 : index
    %c0_4 = arith.constant 0 : index
    %5 = vector.load %arg3[%c0_3, %c0_4] : memref<128x64xbf16, #tpu.memory_space<vmem>>, vector<128x64xbf16>
    tpu.vector_store %arg3[%c0_3, %c0_4], %4 {strides = array<i32>} : memref<128x64xbf16, #tpu.memory_space<vmem>>, vector<128x64xbf16>,
    return
  }
  func.func @transform_0(%arg0: i32) -> (i32, i32) {
    %c0_i32 = arith.constant 0 : i32
    %c0_i32_0 = arith.constant 0 : i32
    return %arg0, %c0_i32 : i32, i32
  }
  func.func @transform_1(%arg0: i32) -> (i32, i32) {
    %c0_i32 = arith.constant 0 : i32
    %c0_i32_0 = arith.constant 0 : i32
    %c0_i32_1 = arith.constant 0 : i32
    return %c0_i32, %c0_i32_0 : i32, i32
  }
  func.func @transform_2(%arg0: i32) -> (i32, i32) {
    %c0_i32 = arith.constant 0 : i32
    %c0_i32_0 = arith.constant 0 : i32
    return %arg0, %c0_i32 : i32, i32
  }
}

</mosaic_0001>

<llo_original>
// kernel: tpu_custom_call.1
$region0: #{tpu_custom_call.1}
  #allocation0 [shape = 'u32[]', space=smem, size = 0x4, offset = 0x4, fixed_abs, tag = 'smem constant byte address 0x4 - core index']
  #allocation1 [shape = 'u32[144,128]{1,0:T(1,128)}', space=vmem, size = 0x12000, scoped, tag = 'internal scratch']
  %s0 = inlined_call_operand.vmem [shape: f32[128,16], index: 0, kind: input, shape index: {}]
  %s1 = inlined_call_operand.vmem [shape: bf16[16,64], index: 1, kind: input, shape index: {}]
  %s2 = inlined_call_operand.vmem [shape: bf16[128,64], index: 2, kind: output, shape index: {}]
  %s3 = sld [smem:[#allocation0]]
  $region18: #{tpu_custom_call.1} parent=0
    _
  %s5 = ssub.s32 1, %s3
  %s6 = scalar_select 0, %s5, %s3
  // Predicated region
  $region2: #{tpu_custom_call.1} parent=0 // pred_check
    _
  $region3: #{tpu_custom_call.1} parent=0 // pred_check_branch
    %8 = sbr.rel (0) target = $region5
  $region4: #{tpu_custom_call.1} parent=0 // pred_region
    _
  $region5: #{tpu_custom_call.1} parent=0 // pred_fallthru
    _
  // Predicated region
  $region6: #{tpu_custom_call.1} parent=0 // pred_check
    _
  $region7: #{tpu_custom_call.1} parent=0 // pred_check_branch
    %10 = sbr.rel (0) target = $region9
  $region8: #{tpu_custom_call.1} parent=0 // pred_region
    _
  $region9: #{tpu_custom_call.1} parent=0 // pred_fallthru
    _
  %v12 = vld [vmem:[%s0] sm:$0xff]
  %v13 = vld [vmem:[%s0 + $0x8] sm:$0xff]
  %v14 = vld [vmem:[%s0 + $0x10] sm:$0xff]
  %v15 = vld [vmem:[%s0 + $0x18] sm:$0xff]
  %v16 = vld [vmem:[%s0 + $0x20] sm:$0xff]
  %v17 = vld [vmem:[%s0 + $0x28] sm:$0xff]
  %v18 = vld [vmem:[%s0 + $0x30] sm:$0xff]
  %v19 = vld [vmem:[%s0 + $0x38] sm:$0xff]
  %v20 = vld [vmem:[%s0 + $0x40] sm:$0xff]
  %v21 = vld [vmem:[%s0 + $0x48] sm:$0xff]
  %v22 = vld [vmem:[%s0 + $0x50] sm:$0xff]
  %v23 = vld [vmem:[%s0 + $0x58] sm:$0xff]
  %v24 = vld [vmem:[%s0 + $0x60] sm:$0xff]
  %v25 = vld [vmem:[%s0 + $0x68] sm:$0xff]
  %v26 = vld [vmem:[%s0 + $0x70] sm:$0xff]
  %v27 = vld [vmem:[%s0 + $0x78] sm:$0xff]
  %v28 = vpack.c.bf16 %v13, %v12
  %v29 = vpack.c.bf16 %v15, %v14
  %v30 = vpack.c.bf16 %v17, %v16
  %v31 = vpack.c.bf16 %v19, %v18
  %v32 = vpack.c.bf16 %v21, %v20
  %v33 = vpack.c.bf16 %v23, %v22
  %v34 = vpack.c.bf16 %v25, %v24
  %v35 = vpack.c.bf16 %v27, %v26
  %v36 = vld [vmem:[%s1] sm:$0xf]
  %v37 = vld [vmem:[%s1 + $0x4] sm:$0xf]
  %v40 = vunpack.c.l.b16 %v36
  %v41 = vunpack.c.l.b16 %v37
  %v42 = vpack.c.b16 %v41, %v40
  %vm44 = vcmask 130048
  %v46 = vsel %vm44, %v28, 0
  %v49 = vsel %vm44, %v29, 0
  %v52 = vsel %vm44, %v30, 0
  %v55 = vsel %vm44, %v31, 0
  %v58 = vsel %vm44, %v32, 0
  %v61 = vsel %vm44, %v33, 0
  %v64 = vsel %vm44, %v34, 0
  %v67 = vsel %vm44, %v35, 0
  %69 = vmatprep.subr.bf16.mxu0 0
  %70 = vmatpush1.bf16.msra.mxu0 %v42
  %71 = vmatprep.subr.bf16.mxu0 0
  %72 = vmatpush1.bf16.msra.mxu0 0
  %73 = vmatprep.subr.bf16.mxu0 0
  %74 = vmatpush1.bf16.msra.mxu0 0
  %75 = vmatprep.subr.bf16.mxu0 0
  %76 = vmatpush1.bf16.msra.mxu0 0
  %77 = vmatprep.subr.bf16.mxu0 0
  %78 = vmatpush1.bf16.msra.mxu0 0
  %79 = vmatprep.subr.bf16.mxu0 0
  %80 = vmatpush1.bf16.msra.mxu0 0
  %81 = vmatprep.subr.bf16.mxu0 0
  %82 = vmatpush1.bf16.msra.mxu0 0
  %83 = vmatprep.subr.bf16.mxu0 0
  %84 = vmatpush1.bf16.msra.mxu0 0
  %85 = vmatprep.subr.bf16.mxu0 0
  %86 = vmatpush1.bf16.msra.mxu0 0
  %87 = vmatprep.subr.bf16.mxu0 0
  %88 = vmatpush1.bf16.msra.mxu0 0
  %89 = vmatprep.subr.bf16.mxu0 0
  %90 = vmatpush1.bf16.msra.mxu0 0
  %91 = vmatprep.subr.bf16.mxu0 0
  %92 = vmatpush1.bf16.msra.mxu0 0
  %93 = vmatprep.subr.bf16.mxu0 0
  %94 = vmatpush1.bf16.msra.mxu0 0
  %95 = vmatprep.subr.bf16.mxu0 0
  %96 = vmatpush1.bf16.msra.mxu0 0
  %97 = vmatprep.subr.bf16.mxu0 0
  %98 = vmatpush1.bf16.msra.mxu0 0
  %99 = vmatprep.subr.bf16.mxu0 0
  %100 = vmatpush1.bf16.msra.mxu0 0
  %101 = vmatprep.mubr.bf16.mxu0 0
  %102 = vmatmul.mubr.bf16.gmra.mrb[0].mxu0 %v46
  %v103 = vpop.f32.mrb[0].mxu0
  %v104 = vadd.f32 0.0, %v103
  %v105 = vpop.f32.mrb[0].mxu0
  %v106 = vpop.f32.mrb[0].mxu0
  %v107 = vadd.f32 0.0, %v106
  %v108 = vpop.f32.mrb[0].mxu0
  %109 = vmatprep.mubr.bf16.mxu0 0
  %110 = vmatmul.mubr.bf16.gmra.mrb[0].mxu0 %v49
  %v111 = vpop.f32.mrb[0].mxu0
  %v112 = vadd.f32 0.0, %v111
  %v113 = vpop.f32.mrb[0].mxu0
  %v114 = vpop.f32.mrb[0].mxu0
  %v115 = vadd.f32 0.0, %v114
  %v116 = vpop.f32.mrb[0].mxu0
  %117 = vmatprep.mubr.bf16.mxu0 0
  %118 = vmatmul.mubr.bf16.gmra.mrb[0].mxu0 %v52
  %v119 = vpop.f32.mrb[0].mxu0
  %v120 = vadd.f32 0.0, %v119
  %v121 = vpop.f32.mrb[0].mxu0
  %v122 = vpop.f32.mrb[0].mxu0
  %v123 = vadd.f32 0.0, %v122
  %v124 = vpop.f32.mrb[0].mxu0
  %125 = vmatprep.mubr.bf16.mxu0 0
  %126 = vmatmul.mubr.bf16.gmra.mrb[0].mxu0 %v55
  %v127 = vpop.f32.mrb[0].mxu0
  %v128 = vadd.f32 0.0, %v127
  %v129 = vpop.f32.mrb[0].mxu0
  %v130 = vpop.f32.mrb[0].mxu0
  %v131 = vadd.f32 0.0, %v130
  %v132 = vpop.f32.mrb[0].mxu0
  %133 = vmatprep.mubr.bf16.mxu0 0
  %134 = vmatmul.mubr.bf16.gmra.mrb[0].mxu0 %v58
  %v135 = vpop.f32.mrb[0].mxu0
  %v136 = vadd.f32 0.0, %v135
  %v137 = vpop.f32.mrb[0].mxu0
  %v138 = vpop.f32.mrb[0].mxu0
  %v139 = vadd.f32 0.0, %v138
  %v140 = vpop.f32.mrb[0].mxu0
  %141 = vmatprep.mubr.bf16.mxu0 0
  %142 = vmatmul.mubr.bf16.gmra.mrb[0].mxu0 %v61
  %v143 = vpop.f32.mrb[0].mxu0
  %v144 = vadd.f32 0.0, %v143
  %v145 = vpop.f32.mrb[0].mxu0
  %v146 = vpop.f32.mrb[0].mxu0
  %v147 = vadd.f32 0.0, %v146
  %v148 = vpop.f32.mrb[0].mxu0
  %149 = vmatprep.mubr.bf16.mxu0 0
  %150 = vmatmul.mubr.bf16.gmra.mrb[0].mxu0 %v64
  %v151 = vpop.f32.mrb[0].mxu0
  %v152 = vadd.f32 0.0, %v151
  %v153 = vpop.f32.mrb[0].mxu0
  %v154 = vpop.f32.mrb[0].mxu0
  %v155 = vadd.f32 0.0, %v154
  %v156 = vpop.f32.mrb[0].mxu0
  %157 = vmatprep.mubr.bf16.mxu0 0
  %158 = vmatmul.mubr.bf16.gmra.mrb[0].mxu0 %v67
  %v159 = vpop.f32.mrb[0].mxu0
  %v160 = vadd.f32 0.0, %v159
  %v161 = vpop.f32.mrb[0].mxu0
  %v162 = vpop.f32.mrb[0].mxu0
  %v163 = vadd.f32 0.0, %v162
  %v164 = vpop.f32.mrb[0].mxu0
  %165 = vdwg.mxu0
  %v166 = vpack.c.bf16 %v107, %v104
  %v167 = vpack.c.bf16 %v115, %v112
  %v168 = vpack.c.bf16 %v123, %v120
  %v169 = vpack.c.bf16 %v131, %v128
  %v170 = vpack.c.bf16 %v139, %v136
  %v171 = vpack.c.bf16 %v147, %v144
  %v172 = vpack.c.bf16 %v155, %v152
  %v173 = vpack.c.bf16 %v163, %v160
  %v182 = vunpack.c.l.b16 %v166
  %v183 = vunpack.c.h.b16 %v166
  %v184 = vunpack.c.l.b16 %v167
  %v185 = vunpack.c.h.b16 %v167
  %v186 = vunpack.c.l.b16 %v168
  %v187 = vunpack.c.h.b16 %v168
  %v188 = vunpack.c.l.b16 %v169
  %v189 = vunpack.c.h.b16 %v169
  %v190 = vunpack.c.l.b16 %v170
  %v191 = vunpack.c.h.b16 %v170
  %v192 = vunpack.c.l.b16 %v171
  %v193 = vunpack.c.h.b16 %v171
  %v194 = vunpack.c.l.b16 %v172
  %v195 = vunpack.c.h.b16 %v172
  %v196 = vunpack.c.l.b16 %v173
  %v197 = vunpack.c.h.b16 %v173
  %v198 = vpack.c.b16 %v182, %v182
  %v199 = vpack.c.b16 %v183, %v183
  %v200 = vpack.c.b16 %v184, %v184
  %v201 = vpack.c.b16 %v185, %v185
  %v202 = vpack.c.b16 %v186, %v186
  %v203 = vpack.c.b16 %v187, %v187
  %v204 = vpack.c.b16 %v188, %v188
  %v205 = vpack.c.b16 %v189, %v189
  %v206 = vpack.c.b16 %v190, %v190
  %v207 = vpack.c.b16 %v191, %v191
  %v208 = vpack.c.b16 %v192, %v192
  %v209 = vpack.c.b16 %v193, %v193
  %v210 = vpack.c.b16 %v194, %v194
  %v211 = vpack.c.b16 %v195, %v195
  %v212 = vpack.c.b16 %v196, %v196
  %v213 = vpack.c.b16 %v197, %v197
  %vm230 = vcmask 519168
  %231 = vst.msk [vmem:[%s2] sm:$0xf] %vm230, %v198
  %232 = vst.msk [vmem:[%s2 + $0x4] sm:$0xf] %vm230, %v199
  %233 = vst.msk [vmem:[%s2 + $0x8] sm:$0xf] %vm230, %v200
  %234 = vst.msk [vmem:[%s2 + $0xc] sm:$0xf] %vm230, %v201
  %235 = vst.msk [vmem:[%s2 + $0x10] sm:$0xf] %vm230, %v202
  %236 = vst.msk [vmem:[%s2 + $0x14] sm:$0xf] %vm230, %v203
  %237 = vst.msk [vmem:[%s2 + $0x18] sm:$0xf] %vm230, %v204
  %238 = vst.msk [vmem:[%s2 + $0x1c] sm:$0xf] %vm230, %v205
  %239 = vst.msk [vmem:[%s2 + $0x20] sm:$0xf] %vm230, %v206
  %240 = vst.msk [vmem:[%s2 + $0x24] sm:$0xf] %vm230, %v207
  %241 = vst.msk [vmem:[%s2 + $0x28] sm:$0xf] %vm230, %v208
  %242 = vst.msk [vmem:[%s2 + $0x2c] sm:$0xf] %vm230, %v209
  %243 = vst.msk [vmem:[%s2 + $0x30] sm:$0xf] %vm230, %v210
  %244 = vst.msk [vmem:[%s2 + $0x34] sm:$0xf] %vm230, %v211
  %245 = vst.msk [vmem:[%s2 + $0x38] sm:$0xf] %vm230, %v212
  %246 = vst.msk [vmem:[%s2 + $0x3c] sm:$0xf] %vm230, %v213
  // Predicated region
  $region10: #{tpu_custom_call.1} parent=0 // pred_check
    _
  $region11: #{tpu_custom_call.1} parent=0 // pred_check_branch
    %248 = sbr.rel (0) target = $region13
  $region12: #{tpu_custom_call.1} parent=0 // pred_region
    _
  $region13: #{tpu_custom_call.1} parent=0 // pred_fallthru
    _
  // Predicated region
  $region14: #{tpu_custom_call.1} parent=0 // pred_check
    _
  $region15: #{tpu_custom_call.1} parent=0 // pred_check_branch
    %250 = sbr.rel (0) target = $region17
  $region16: #{tpu_custom_call.1} parent=0 // pred_region
    _
  $region17: #{tpu_custom_call.1} parent=0 // pred_fallthru
    _

</llo_original>
